<compile_context>
chip_gen: v7x
topology: tpu7x:2x2x1
jax: 0.10.0
libtpu: 0.0.40
codegen_flags: <defaults>
</compile_context>

<pallas_src>
import functools

import jax
import jax.numpy as jnp
from jax.experimental import pallas as pl
from jax.experimental.pallas import tpu as pltpu


def _label_smoothing_kernel(x_ref, t_ref, out_ref, *,
                            confidence, smooth_over_c, n_total, tile_rows,
                            needs_row_mask):
    x = x_ref[...]                                   # (TN, C), native dtype
    t = t_ref[...]                                   # (TN, 1) int32

    # Keep bf16 elementwise work in bf16 (v6e/v7x packed vregs); accumulate
    # reductions in f32.  f32 inputs take the plain f32 path.
    if x.dtype != jnp.bfloat16:
        x = x.astype(jnp.float32)

    # Numerically stable log-sum-exp over classes; never materialize the full
    # (TN, C) log-probs tile or a one-hot.
    m = jnp.max(x, axis=-1, keepdims=True)                                # (TN, 1)
    s = jnp.sum(jnp.exp(x - m), axis=-1, keepdims=True,
                dtype=jnp.float32)                                        # (TN, 1)
    lse = m.astype(jnp.float32) + jnp.log(s)                              # (TN, 1)

    # gather(dim=-1, index=target) via lane-iota compare + masked reduce.
    col = jax.lax.broadcasted_iota(jnp.int32, x.shape, 1)                 # (TN, C)
    x_t = jnp.sum(jnp.where(col == t, x, jnp.zeros([], x.dtype)),
                  axis=-1, keepdims=True, dtype=jnp.float32)              # (TN, 1)
    sum_x = jnp.sum(x, axis=-1, keepdims=True, dtype=jnp.float32)         # (TN, 1)

    # confidence*(lse - x_t) + smoothing*(lse - sum_x/C)
    #   == lse - confidence*x_t - (smoothing/C)*sum_x   (confidence+smoothing==1)
    loss = lse - confidence * x_t - smooth_over_c * sum_x                 # (TN, 1)

    if needs_row_mask:
        # Mask tail rows beyond the true batch size (cdiv grid).  Keep this a
        # select, not a multiply, so NaN/Inf from padded rows cannot propagate.
        i = pl.program_id(0)
        row = jax.lax.broadcasted_iota(jnp.int32, loss.shape, 0) + i * tile_rows
        loss = jnp.where(row < n_total, loss, 0.0)

    # Per-tile partial sum, splatted into this tile's own lane-dense block.
    out_ref[...] = jnp.full(out_ref.shape, jnp.sum(loss), dtype=jnp.float32)


def label_smoothing_loss(x, target, smoothing=0.1, *, tile_rows=None):
    """Equivalent of LabelSmoothing(smoothing)(x, target) -> scalar loss."""
    n, c = x.shape
    confidence = 1.0 - smoothing
    itemsize = jnp.dtype(x.dtype).itemsize

    # ---- generation-aware VMEM budget ------------------------------------
    try:
        vmem_cap = getattr(pltpu.get_tpu_info(), "vmem_capacity_bytes",
                           64 * 1024 * 1024)
    except Exception:
        vmem_cap = 64 * 1024 * 1024                     # conservative (v7x-like)
    if vmem_cap >= 96 * 1024 * 1024:                    # v5e / v6e (128 MiB)
        vmem_limit = 64 * 1024 * 1024
        x_tile_budget_f32 = 8 * 1024 * 1024
    else:                                               # v7x (64 MiB physical)
        vmem_limit = 48 * 1024 * 1024
        x_tile_budget_f32 = 4 * 1024 * 1024

    if tile_rows is None:
        # Size by the full working set per grid step:
        #   2x input tile (double-buffered pipeline) + ~4 f32-wide temporaries
        #   per element (upcast / exp result / select result / int32 iota).
        tr_budget = x_tile_budget_f32 // max(1, c * 4)
        ws_per_row = c * (2 * itemsize + 4 * 4)
        tr_ws = (vmem_limit * 3 // 4) // max(1, ws_per_row)
        tr = max(8, (min(tr_budget, tr_ws) // 8) * 8)
        if n <= 8:
            tile_rows = n                               # single full-array block
        else:
            # Keep >= 2 grid steps so both v7x TensorCores get work under
            # dimension_semantics=("parallel",).
            half = max(8, ((((n + 1) // 2) + 7) // 8) * 8)
            tile_rows = min(tr, half)
    # TODO(synk): vocab-scale C (class dim too big for a VMEM tile even at 8
    # rows) needs a second "arbitrary" class-dim grid axis with an online
    # log-sum-exp carry; not implemented here.

    num_tiles = pl.cdiv(n, tile_rows)
    needs_row_mask = (n % tile_rows) != 0

    target2d = target.astype(jnp.int32).reshape(n, 1)

    kernel = functools.partial(
        _label_smoothing_kernel,
        confidence=confidence,
        smooth_over_c=smoothing / c,
        n_total=n,
        tile_rows=tile_rows,
        needs_row_mask=needs_row_mask,
    )

    cost = pl.CostEstimate(
        flops=8 * n * c,
        transcendentals=n * c,
        bytes_accessed=n * c * itemsize + n * 4 + num_tiles * 8 * 128 * 4,
    )

    partials = pl.pallas_call(
        kernel,
        out_shape=jax.ShapeDtypeStruct((num_tiles, 8, 128), jnp.float32),
        grid_spec=pltpu.PrefetchScalarGridSpec(
            num_scalar_prefetch=0,
            grid=(num_tiles,),
            in_specs=[
                pl.BlockSpec((tile_rows, c), lambda i: (i, 0)),
                pl.BlockSpec((tile_rows, 1), lambda i: (i, 0)),
            ],
            out_specs=pl.BlockSpec((1, 8, 128), lambda i: (i, 0, 0)),
        ),
        compiler_params=pltpu.CompilerParams(
            dimension_semantics=("parallel",),
            vmem_limit_bytes=vmem_limit,
        ),
        cost_estimate=cost,
    )(x, target2d)

    # Final reduction across tiles + mean over the batch in the wrapper so the
    # grid axis can stay "parallel".
    return jnp.sum(partials[:, 0, 0]) / jnp.float32(n)


def _reference(x, target, smoothing):
    confidence = 1.0 - smoothing
    logprobs = jax.nn.log_softmax(x.astype(jnp.float32), axis=-1)
    nll = -jnp.take_along_axis(logprobs, target[:, None], axis=-1)[:, 0]
    smooth = -jnp.mean(logprobs, axis=-1)
    return jnp.mean(confidence * nll + smoothing * smooth)


if __name__ == "__main__":
    key = jax.random.PRNGKey(0)
    kx, kt = jax.random.split(key)

    N, C = 16, 32          # small shapes: batch=16, num_classes=32
    smoothing = 0.1

    x = jax.random.normal(kx, (N, C), dtype=jnp.float32)
    target = jax.random.randint(kt, (N,), 0, C, dtype=jnp.int32)

    loss = label_smoothing_loss(x, target, smoothing=smoothing)
    loss = jax.block_until_ready(loss)

    ref = _reference(x, target, smoothing)
    assert jnp.allclose(loss, ref, atol=1e-5, rtol=1e-5), (loss, ref)

    print("KERNEL_OK")
</pallas_src>

<mosaic_0001>
module attributes {stable_mosaic.version = 11 : i64} {
  func.func @_label_smoothing_kernel(%arg0: i32, %arg1: memref<8x32xf32, #tpu.memory_space<vmem>>, %arg2: memref<8x1xi32, #tpu.memory_space<vmem>>, %arg3: memref<1x8x128xf32, #tpu.memory_space<vmem>>) attributes {dimension_semantics = [#tpu.dimension_semantics<parallel>], iteration_bounds = array<i64: 2>, scalar_prefetch = 0 : i64, scratch_operands = 0 : i64, tpu.core_type = #tpu.core_type<tc>, window_params = [{transform_indices = @transform_0, window_bounds = array<i64: 8, 32>}, {transform_indices = @transform_1, window_bounds = array<i64: 8, 1>}, {transform_indices = @transform_2, window_bounds = array<i64: 1, 8, 128>}]} {
    %c0 = arith.constant 0 : index
    %c0_0 = arith.constant 0 : index
    %0 = vector.load %arg1[%c0, %c0_0] : memref<8x32xf32, #tpu.memory_space<vmem>>, vector<8x32xf32>
    %c0_1 = arith.constant 0 : index
    %c0_2 = arith.constant 0 : index
    %1 = vector.load %arg2[%c0_1, %c0_2] : memref<8x1xi32, #tpu.memory_space<vmem>>, vector<8x1xi32>
    %cst = arith.constant dense<0xFF800000> : vector<8xf32>
    %2 = vector.multi_reduction <maximumf>, %0, %cst [1] : vector<8x32xf32> to vector<8xf32>
    %3 = vector.shape_cast %2 : vector<8xf32> to vector<8x1xf32>
    %4 = vector.broadcast %3 : vector<8x1xf32> to vector<8x32xf32>
    %5 = arith.subf %0, %4 : vector<8x32xf32>
    %6 = math.exp %5 : vector<8x32xf32>
    %cst_3 = arith.constant dense<0.000000e+00> : vector<8xf32>
    %7 = vector.multi_reduction <add>, %6, %cst_3 [1] : vector<8x32xf32> to vector<8xf32>
    %8 = vector.shape_cast %7 : vector<8xf32> to vector<8x1xf32>
    %9 = math.log %8 : vector<8x1xf32>
    %10 = arith.addf %3, %9 : vector<8x1xf32>
    %11 = tpu.iota {dimensions = array<i32: 1>} : vector<8x32xi32>
    %12 = vector.broadcast %1 : vector<8x1xi32> to vector<8x32xi32>
    %13 = arith.cmpi eq, %11, %12 : vector<8x32xi32>
    %cst_4 = arith.constant 0.000000e+00 : f32
    %14 = vector.broadcast %cst_4 : f32 to vector<8x32xf32>
    %15 = arith.select %13, %0, %14 : vector<8x32xi1>, vector<8x32xf32>
    %cst_5 = arith.constant dense<0.000000e+00> : vector<8xf32>
    %16 = vector.multi_reduction <add>, %15, %cst_5 [1] : vector<8x32xf32> to vector<8xf32>
    %17 = vector.shape_cast %16 : vector<8xf32> to vector<8x1xf32>
    %cst_6 = arith.constant dense<0.000000e+00> : vector<8xf32>
    %18 = vector.multi_reduction <add>, %0, %cst_6 [1] : vector<8x32xf32> to vector<8xf32>
    %19 = vector.shape_cast %18 : vector<8xf32> to vector<8x1xf32>
    %cst_7 = arith.constant 0.899999976 : f32
    %20 = vector.broadcast %cst_7 : f32 to vector<8x1xf32>
    %21 = arith.mulf %20, %17 : vector<8x1xf32>
    %22 = arith.subf %10, %21 : vector<8x1xf32>
    %cst_8 = arith.constant 3.125000e-03 : f32
    %23 = vector.broadcast %cst_8 : f32 to vector<8x1xf32>
    %24 = arith.mulf %23, %19 : vector<8x1xf32>
    %25 = arith.subf %22, %24 : vector<8x1xf32>
    %26 = vector.shape_cast %25 : vector<8x1xf32> to vector<1x8x1xf32>
    %cst_9 = arith.constant dense<0.000000e+00> : vector<1xf32>
    %27 = vector.multi_reduction <add>, %26, %cst_9 [1, 2] : vector<1x8x1xf32> to vector<1xf32>
    %28 = vector.shape_cast %27 : vector<1xf32> to vector<1x1x1xf32>
    %29 = vector.extract %28[0, 0, 0] : f32 from vector<1x1x1xf32>
    %30 = vector.broadcast %29 : f32 to vector<1x8x128xf32>
    %c0_10 = arith.constant 0 : index
    %c0_11 = arith.constant 0 : index
    %c0_12 = arith.constant 0 : index
    %31 = vector.load %arg3[%c0_10, %c0_11, %c0_12] : memref<1x8x128xf32, #tpu.memory_space<vmem>>, vector<1x8x128xf32>
    tpu.vector_store %arg3[%c0_10, %c0_11, %c0_12], %30 {strides = array<i32>} : memref<1x8x128xf32, #tpu.memory_space<vmem>>, vector<1x8x128xf32>,
    return
  }
  func.func @transform_0(%arg0: i32) -> (i32, i32) {
    %c0_i32 = arith.constant 0 : i32
    %c0_i32_0 = arith.constant 0 : i32
    return %arg0, %c0_i32 : i32, i32
  }
  func.func @transform_1(%arg0: i32) -> (i32, i32) {
    %c0_i32 = arith.constant 0 : i32
    %c0_i32_0 = arith.constant 0 : i32
    return %arg0, %c0_i32 : i32, i32
  }
  func.func @transform_2(%arg0: i32) -> (i32, i32, i32) {
    %c0_i32 = arith.constant 0 : i32
    %c0_i32_0 = arith.constant 0 : i32
    %c0_i32_1 = arith.constant 0 : i32
    return %arg0, %c0_i32, %c0_i32_0 : i32, i32, i32
  }
}

</mosaic_0001>

<llo_original>
// kernel: tpu_custom_call.1
$region0: #{tpu_custom_call.1}
  #allocation0 [shape = 'u32[]', space=smem, size = 0x4, offset = 0x4, fixed_abs, tag = 'smem constant byte address 0x4 - core index']
  #allocation1 [shape = 'u32[144,128]{1,0:T(1,128)}', space=vmem, size = 0x12000, scoped, tag = 'internal scratch']
  %s0 = inlined_call_operand.vmem [shape: f32[16,32], index: 0, kind: input, shape index: {}]
  %s1 = inlined_call_operand.vmem [shape: s32[16,1], index: 1, kind: input, shape index: {}]
  %s2 = inlined_call_operand.hbm [shape: f32[2,8,128], index: 2, kind: output, shape index: {}]
  %s3 = sld [smem:[#allocation0]]
  $region41: #{tpu_custom_call.1} parent=0
    _
  %s5 = ssub.s32 1, %s3
  %s6 = scalar_select 0, %s5, %s3
  $region1: #{tpu_custom_call.1} parent=0
    #allocation2 [shape = 'u8[8192]{0}', space=vmem, size = 0x2000, scoped, tag = 'output window, operand 0']
    #allocation3 [shape = 's32[2]{0}', space=sflag, size = 0x8, scoped, tag = 'scoped memory for tpu_custom_call.1']
    %7 = vsyncpa [#allocation3], 0
    %s8 = scalar_lea.sflag [#allocation3], 1
    %9 = vsyncpa %s8, 0
    loop: start=0, step=1, limit=4
    $region2: #{tpu_custom_call.1} parent=1 // loop_pre_header
      _
    $region3: #{tpu_custom_call.1} parent=1 // loop_header
      %s11 = sphi 0, %s15
      %p12 = scmp.ge.s32.totalorder %s11, 4
      %s21 = sphi 0, %s23
      %s24 = sphi 0, %s21
      %s25 = sphi 0, %s24
      %s41 = sphi 0, %s25
      %s47 = sphi 0, %s49
      %s50 = sphi 0, %s47
      %s51 = sphi 0, %s50
      %s67 = sphi 0, %s51
      %s73 = sphi 0, %s75
      %s76 = sphi 0, %s73
      %s77 = sphi 0, %s76
      %s93 = sphi 0, %s77
    $region4: #{tpu_custom_call.1} parent=1 // loop_header_branch
      %14 = sbr.rel (%p12) target = $region8
    $region5: #{tpu_custom_call.1} parent=1 // loop_body
      %s16 = ssub.s32 %s11, 1
      %s17 = ssub.s32 %s11, 2
      %s18 = sadd.s32 %s11, 1
      %s19 = ssub.s32 %s11, %s18
      %p20 = scmp.eq.s32.totalorder %s19, 0
      %s22 = sadd.s32 %s21, 1
      %s23 = scalar_select %p20, %s21, %s22
      %p26 = pneg %p20
      %p27 = scmp.eq.s32.totalorder %s11, 1
      %p28 = por %p26, %p27
      %p29 = scmp.ne.s32.totalorder %s21, %s24
      %p30 = scmp.eq.s32.totalorder %s11, 0
      %p31 = por %p29, %p30
      %p32 = scmp.ne.s32.totalorder %s21, %s24
      %p33 = scmp.eq.s32.totalorder %s16, 1
      %p34 = por %p32, %p33
      %p35 = scmp.ne.s32.totalorder %s24, %s25
      %p36 = scmp.eq.s32.totalorder %s16, 0
      %p37 = por %p35, %p36
      %p38 = scmp.ne.s32.totalorder %s24, %s25
      %p39 = scmp.eq.s32.totalorder %s17, 1
      %p40 = por %p38, %p39
      %p42 = scmp.ne.s32.totalorder %s25, %s41
      %p43 = scmp.eq.s32.totalorder %s17, 0
      %p44 = por %p42, %p43
      %s45 = ssub.s32 %s11, %s18
      %p46 = scmp.eq.s32.totalorder %s45, 0
      %s48 = sadd.s32 %s47, 1
      %s49 = scalar_select %p46, %s47, %s48
      %p52 = pneg %p46
      %p53 = scmp.eq.s32.totalorder %s11, 1
      %p54 = por %p52, %p53
      %p55 = scmp.ne.s32.totalorder %s47, %s50
      %p56 = scmp.eq.s32.totalorder %s11, 0
      %p57 = por %p55, %p56
      %p58 = scmp.ne.s32.totalorder %s47, %s50
      %p59 = scmp.eq.s32.totalorder %s16, 1
      %p60 = por %p58, %p59
      %p61 = scmp.ne.s32.totalorder %s50, %s51
      %p62 = scmp.eq.s32.totalorder %s16, 0
      %p63 = por %p61, %p62
      %p64 = scmp.ne.s32.totalorder %s50, %s51
      %p65 = scmp.eq.s32.totalorder %s17, 1
      %p66 = por %p64, %p65
      %p68 = scmp.ne.s32.totalorder %s51, %s67
      %p69 = scmp.eq.s32.totalorder %s17, 0
      %p70 = por %p68, %p69
      %s71 = ssub.s32 %s11, %s18
      %p72 = scmp.eq.s32.totalorder %s71, 0
      %s74 = sadd.s32 %s73, 1
      %s75 = scalar_select %p72, %s73, %s74
      %p78 = pneg %p72
      %p79 = scmp.eq.s32.totalorder %s11, 1
      %p80 = por %p78, %p79
      %p81 = scmp.ne.s32.totalorder %s73, %s76
      %p82 = scmp.eq.s32.totalorder %s11, 0
      %p83 = por %p81, %p82
      %p84 = scmp.ne.s32.totalorder %s73, %s76
      %p85 = scmp.eq.s32.totalorder %s16, 1
      %p86 = por %p84, %p85
      %p87 = scmp.ne.s32.totalorder %s76, %s77
      %p88 = scmp.eq.s32.totalorder %s16, 0
      %p89 = por %p87, %p88
      %p90 = scmp.ne.s32.totalorder %s76, %s77
      %p91 = scmp.eq.s32.totalorder %s17, 1
      %p92 = por %p90, %p91
      %p94 = scmp.ne.s32.totalorder %s77, %s93
      %p95 = scmp.eq.s32.totalorder %s17, 0
      %p96 = por %p94, %p95
      %p97 = scmp.le.s32.totalorder 1, %s11
      %p98 = scmp.lt.s32.totalorder %s11, 3
      %p99 = pnand %p97, %p98
      %p100 = pneg %p99
      // Predicated region
      $region9: #{tpu_custom_call.1} parent=5 // pred_check
        _
      $region10: #{tpu_custom_call.1} parent=5 // pred_check_branch
        %102 = sbr.rel (%p99) target = $region12
      $region11: #{tpu_custom_call.1} parent=5 // pred_region
        %s103 = ssub.s32 %s11, 1
      $region12: #{tpu_custom_call.1} parent=5 // pred_fallthru
        _
      %p104 = scmp.lt.s32.totalorder %s11, 2
      // Predicated region
      $region13: #{tpu_custom_call.1} parent=5 // pred_check
        %p105 = pneg %p104
      $region14: #{tpu_custom_call.1} parent=5 // pred_check_branch
        %107 = sbr.rel (%p105) target = $region16
      $region15: #{tpu_custom_call.1} parent=5 // pred_region
        // Predicated region
        $region17: #{tpu_custom_call.1} parent=15 // pred_check
          %p108 = pneg %p31
        $region18: #{tpu_custom_call.1} parent=15 // pred_check_branch
          %110 = sbr.rel (%p108) target = $region20
        $region19: #{tpu_custom_call.1} parent=15 // pred_region
          %p111 = scmp.lt.s32.totalorder %s11, 1
          %s112 = scalar_select %p111, %s11, 1
          %s113 = smul.addr %s112, 8
          %s114 = scalar_lea.vmem %s0, %s113
        $region20: #{tpu_custom_call.1} parent=15 // pred_fallthru
          _
        // Predicated region
        $region21: #{tpu_custom_call.1} parent=15 // pred_check
          %p115 = pneg %p57
        $region22: #{tpu_custom_call.1} parent=15 // pred_check_branch
          %117 = sbr.rel (%p115) target = $region24
        $region23: #{tpu_custom_call.1} parent=15 // pred_region
          %p118 = scmp.lt.s32.totalorder %s11, 1
          %s119 = scalar_select %p118, %s11, 1
          %s120 = smul.addr %s119, 8
          %s121 = scalar_lea.vmem %s1, %s120
        $region24: #{tpu_custom_call.1} parent=15 // pred_fallthru
          _
      $region16: #{tpu_custom_call.1} parent=5 // pred_fallthru
        _
      %p122 = scmp.le.s32.totalorder 1, %s11
      %p123 = scmp.lt.s32.totalorder %s11, 3
      %p124 = pnand %p122, %p123
      %p125 = pneg %p124
      // Predicated region
      $region25: #{tpu_custom_call.1} parent=5 // pred_check
        _
      $region26: #{tpu_custom_call.1} parent=5 // pred_check_branch
        %127 = sbr.rel (%p124) target = $region28
      $region27: #{tpu_custom_call.1} parent=5 // pred_region
        %s128 = ssub.s32 %s11, 1
        %p129 = scmp.lt.s32.totalorder %s16, 1
        %s130 = scalar_select %p129, %s16, 1
        %s131 = smul.addr %s130, 8
        %s132 = scalar_lea.vmem %s0, %s131
        %p133 = pneg %p37
        %p134 = pneg %p34
        %p135 = scmp.lt.s32.totalorder %s16, 1
        %s136 = scalar_select %p135, %s16, 1
        %s137 = smul.addr %s136, 8
        %s138 = scalar_lea.vmem %s1, %s137
        %p139 = pneg %p63
        %p140 = pneg %p60
        %p141 = pneg %p89
        %p142 = pneg %p86
        %s143 = sand.u32 %s76, 1
        %s144 = scalar_lea.sflag [#allocation3], %s143
        %s145 = sand.u32 %s76, 1
        %s146 = smul.addr %s145, 8
        %s147 = scalar_lea.vmem [#allocation2], %s146
        %p148 = scmp.lt.s32.totalorder %s16, 1
        %s149 = scalar_select %p148, %s16, 1
        %s150 = smul.addr %s149, 8
        %s151 = scalar_lea.vmem %s0, %s150
        %p152 = scmp.lt.s32.totalorder %s16, 1
        %s153 = scalar_select %p152, %s16, 1
        %s154 = smul.addr %s153, 8
        %s155 = scalar_lea.vmem %s1, %s154
        %v156 = vld [vmem:[%s151] sm:$0xff]
        %v157 = vld [vmem:[%s155] sm:$0xff]
        %vm158 = vcmask 261120
        %v159 = vsel %vm158, %v156, -inf
        %160 = vmax.xlane.f32.xlu0 %v159
        %v161 = vpop.xlane.xlu0 %160
        %v162 = vsub.f32 %v156, %v161
        %v163 = vmul.f32 %v162, 1.442695
        %v164 = vpow.pop %v163
        %v165 = vsel %vm158, %v164, 0.0
        %166 = vadd.xlane.f32.xlu0 %v165
        %v167 = vpop.xlane.xlu0 %166
        %v168 = vlog2.pop %v167
        %v169 = vmul.f32 %v168, 0.6931472
        %v170 = vadd.f32 %v161, %v169
        %v171 = vlaneseq
        %v172 = vand.u32 %v171, 127
        %173 = vset.pattern.permute.xlu0 0
        %174 = vperm.xlu0 %173, %v157
        %v175 = vpop.permute.xlu0 %174
        %vm176 = vcmp.eq.s32.totalorder %v172, %v175
        %v177 = vsel %vm176, %v156, 0.0
        %v178 = vsel %vm158, %v177, 0.0
        %179 = vadd.xlane.f32.xlu0 %v178
        %v180 = vpop.xlane.xlu0 %179
        %v181 = vsel %vm158, %v156, 0.0
        %182 = vadd.xlane.f32.xlu0 %v181
        %v183 = vpop.xlane.xlu0 %182
        %v184 = vmul.f32 %v180, 0.9
        %v185 = vsub.f32 %v170, %v184
        %v186 = vmul.f32 %v183, 0.003125
        %v187 = vsub.f32 %v185, %v186
        %vm188 = vcmask 7168
        %v189 = vsel %vm188, %v187, 0.0
        %190 = vadd.xlane.f32.xlu0 %v189
        %v191 = vpop.xlane.xlu0 %190
        %v192 = vrot.slane %v191, 4
        %v193 = vadd.f32 %v191, %v192
        %v194 = vrot.slane %v193, 2
        %v195 = vadd.f32 %v193, %v194
        %v196 = vrot.slane %v195, 1
        %v197 = vadd.f32 %v195, %v196
        %s198 = vtos %v197
        %v199 = vstv %s198
        %200 = vst [vmem:[%s147] sm:$0xff] %v199
        %s201 = sand.u32 %s76, 1
        %s202 = scalar_lea.sflag [#allocation3], %s201
        %s203 = sand.u32 %s76, 1
        %s204 = smul.addr %s203, 8
        %s205 = scalar_lea.vmem [#allocation2], %s204
        // Predicated region
        $region29: #{tpu_custom_call.1} parent=27 // pred_check
          %p206 = pneg %p86
        $region30: #{tpu_custom_call.1} parent=27 // pred_check_branch
          %208 = sbr.rel (%p206) target = $region32
        $region31: #{tpu_custom_call.1} parent=27 // pred_region
          %s210 = ssub.s32 128, 128
          %211 = vsyncadd %s202, %s210
          %s212 = smul.addr %s16, 128
          %s213 = scalar_lea.hbm %s2, %s212
          %s215 = sshll.u32 %s205, 4
          %s216 = int_to_ptr.vmem [resolvable:$true] %s215
          %218 = dma.vmem_to_hbm [thread:$0]  %s216, 128, %s213, %s202
        $region32: #{tpu_custom_call.1} parent=27 // pred_fallthru
          _
      $region28: #{tpu_custom_call.1} parent=5 // pred_fallthru
        _
      %p219 = scmp.le.s32.totalorder 2, %s11
      // Predicated region
      $region33: #{tpu_custom_call.1} parent=5 // pred_check
        %p220 = pneg %p219
      $region34: #{tpu_custom_call.1} parent=5 // pred_check_branch
        %222 = sbr.rel (%p220) target = $region36
      $region35: #{tpu_custom_call.1} parent=5 // pred_region
        %s223 = ssub.s32 %s11, 2
        // Predicated region
        $region37: #{tpu_custom_call.1} parent=35 // pred_check
          %p224 = pneg %p92
        $region38: #{tpu_custom_call.1} parent=35 // pred_check_branch
          %226 = sbr.rel (%p224) target = $region40
        $region39: #{tpu_custom_call.1} parent=35 // pred_region
          %s227 = sand.u32 %s77, 1
          %s228 = scalar_lea.sflag [#allocation3], %s227
          %s229 = sand.u32 %s77, 1
          %s230 = smul.addr %s229, 8
          %s231 = scalar_lea.vmem [#allocation2], %s230
          %232 = dma.done %s228, 128
        $region40: #{tpu_custom_call.1} parent=35 // pred_fallthru
          _
      $region36: #{tpu_custom_call.1} parent=5 // pred_fallthru
        _
    $region6: #{tpu_custom_call.1} parent=1 // loop_footer
      %s15 = sadd.s32 1, %s11
    $region7: #{tpu_custom_call.1} parent=1 // loop_footer_branch
      %10 = sbr.rel target = $region3
    $region8: #{tpu_custom_call.1} parent=1 // loop_exit
      _
    %233 = vsyncpa [#allocation3], 1
    %s234 = scalar_lea.sflag [#allocation3], 1
    %235 = vsyncpa %s234, 1

</llo_original>
